<compile_context>
chip_gen: v7x
topology: tpu7x:2x2x1
jax: 0.10.0
libtpu: 0.0.40
codegen_flags: <defaults>
</compile_context>

<pallas_src>
import functools

import jax
import jax.numpy as jnp
from jax.experimental import pallas as pl
from jax.experimental.pallas import tpu as pltpu

LN_EPS = 1e-7                       # DeBERTa-v2 default layer_norm_eps
LANE = 128
FFN_TILE_I = 512                    # intermediate-dim tile (streamed FFN path)
ROW_TILE_CANDIDATES = (2048, 1024, 512, 256, 128, 64, 32, 16, 8)


def _vmem_limit_bytes():
    """Generation-dependent scoped-VMEM limit (128 MiB chips vs v7x 64 MiB)."""
    cap = 64 * 1024 * 1024
    try:
        cap = int(pltpu.get_tpu_info().vmem_capacity_bytes)
    except Exception:
        pass
    return min((cap * 3) // 4, 100 * 1024 * 1024)


VMEM_LIMIT_BYTES = _vmem_limit_bytes()


def _cparams(*semantics):
    return pltpu.CompilerParams(dimension_semantics=tuple(semantics),
                                vmem_limit_bytes=VMEM_LIMIT_BYTES)


def _wspec(shape, index_map):
    """BlockSpec for a grid-invariant weight block: single-buffer it so the
    pipeline does not waste VMEM double-buffering a block that never changes."""
    try:
        return pl.BlockSpec(shape, index_map, pipeline_mode=pl.Buffered(1))
    except Exception:  # older jax without pipeline_mode / pl.Buffered
        return pl.BlockSpec(shape, index_map)


def _row_tile(m):
    for t in ROW_TILE_CANDIDATES:
        if t <= m and m % t == 0:
            return t
    return m


def _layer_norm(x, gamma, beta):
    mu = jnp.mean(x, axis=-1, keepdims=True)
    var = jnp.mean((x - mu) ** 2, axis=-1, keepdims=True)
    return (x - mu) * jax.lax.rsqrt(var + LN_EPS) * gamma + beta


# --------------------------------------------------------------------------
# Kernel 1: embedding LayerNorm + mask (DebertaV2Embeddings tail)  f32 -> bf16
# --------------------------------------------------------------------------
def embed_ln_kernel(x_ref, g_ref, b_ref, m_ref, o_ref):
    x = x_ref[0]                                   # (S, H) f32
    y = _layer_norm(x, g_ref[0], b_ref[0]) * m_ref[0]
    o_ref[0] = y.astype(o_ref.dtype)


# --------------------------------------------------------------------------
# Kernel 2a: self-attention block (fused QKV, MHA, out proj, residual + LN)
# --------------------------------------------------------------------------
def attention_kernel(num_heads,
                     x_ref, mq_ref, mk_ref,
                     wqkv_ref, bqkv_ref, wo_ref, bo_ref, g1_ref, be1_ref,
                     o_ref, ctx_ref):
    x = x_ref[0]                                   # (S, H) bf16
    S, H = x.shape
    dh = H // num_heads
    xf = x.astype(jnp.float32)

    # One fused (S,H) x (H,3H) projection.
    qkv = jnp.dot(x, wqkv_ref[...],
                  preferred_element_type=jnp.float32) + bqkv_ref[0]  # (S,3H)

    # Additive attention bias rebuilt in-kernel from two mask vectors
    # (no (B,S,S) f32 tensor in HBM): -1e9 where query or key is padding.
    bias = (1.0 - mq_ref[0] * mk_ref[0]) * (-1e9)                    # (S, S)
    scale = 1.0 / jnp.sqrt(jnp.float32(dh))

    qkv_b = qkv.astype(jnp.bfloat16)
    # per-head static lane slices; per-head context written straight into the
    # (S,H) f32 VMEM scratch (no concatenate / relayout copies).
    for h in range(num_heads):
        qh = qkv_b[:, h * dh:(h + 1) * dh]                           # (S, dh)
        kh = qkv_b[:, H + h * dh:H + (h + 1) * dh]
        vh = qkv_b[:, 2 * H + h * dh:2 * H + (h + 1) * dh]
        scores = jax.lax.dot_general(                                # q @ k.T
            qh, kh, (((1,), (1,)), ((), ())),
            preferred_element_type=jnp.float32) * scale + bias       # (S, S)
        scores = scores - jnp.max(scores, axis=-1, keepdims=True)
        probs = jnp.exp(scores)
        probs = probs * pl.reciprocal(
            jnp.sum(probs, axis=-1, keepdims=True), approx=True)
        ctx_ref[:, h * dh:(h + 1) * dh] = jnp.dot(
            probs.astype(jnp.bfloat16), vh,
            preferred_element_type=jnp.float32)                      # (S, dh)

    attn_out = jnp.dot(ctx_ref[...].astype(jnp.bfloat16), wo_ref[...],
                       preferred_element_type=jnp.float32) + bo_ref[0]
    o_ref[0] = _layer_norm(attn_out + xf, g1_ref[0], be1_ref[0]
                           ).astype(o_ref.dtype)


# --------------------------------------------------------------------------
# Kernel 2b-resident: fused FFN, full w1/w2 resident in VMEM, row-tiled only.
# --------------------------------------------------------------------------
def ffn_resident_kernel(x_ref, w1_ref, b1_ref, w2_ref, b2_ref, g2_ref, be2_ref,
                        o_ref):
    x = x_ref[...]                                                   # (TM, H)
    xf = x.astype(jnp.float32)
    h = jnp.dot(x, w1_ref[...],
                preferred_element_type=jnp.float32) + b1_ref[0]      # (TM, I)
    h = jax.nn.gelu(h, approximate=False)
    y = jnp.dot(h.astype(jnp.bfloat16), w2_ref[...],
                preferred_element_type=jnp.float32) + b2_ref[0] + xf
    o_ref[...] = _layer_norm(y, g2_ref[0], be2_ref[0]).astype(o_ref.dtype)


# --------------------------------------------------------------------------
# Kernel 2b-tiled: fused FFN streamed over intermediate-dim tiles (axis 1),
#                  f32 (TM,H) accumulator with pl.when init/finalize.
# --------------------------------------------------------------------------
def ffn_tiled_kernel(x_ref, w1_ref, b1_ref, w2_ref, b2_ref, g2_ref, be2_ref,
                     o_ref, acc_ref):
    i = pl.program_id(1)

    @pl.when(i == 0)
    def _():
        acc_ref[...] = jnp.zeros_like(acc_ref)

    x = x_ref[...]                                                   # (TM, H)
    h = jnp.dot(x, w1_ref[...],
                preferred_element_type=jnp.float32) + b1_ref[0]      # (TM, TI)
    h = jax.nn.gelu(h, approximate=False)
    acc_ref[...] += jnp.dot(h.astype(jnp.bfloat16), w2_ref[...],
                            preferred_element_type=jnp.float32)      # (TM, H)

    @pl.when(i == pl.num_programs(1) - 1)
    def _():
        y = acc_ref[...] + b2_ref[0] + x.astype(jnp.float32)
        o_ref[...] = _layer_norm(y, g2_ref[0], be2_ref[0]).astype(o_ref.dtype)


# --------------------------------------------------------------------------
# Kernel 3: ContextPooler ([CLS] dense + GELU) + classifier (lane-padded out)
# --------------------------------------------------------------------------
def head_kernel(x_ref, wp_ref, bp_ref, wc_ref, bc_ref, o_ref):
    xb = x_ref[...]                                                  # (B, H) bf16
    pooled = jnp.dot(xb, wp_ref[...],
                     preferred_element_type=jnp.float32) + bp_ref[0]
    pooled = jax.nn.gelu(pooled, approximate=False)
    o_ref[...] = jnp.dot(pooled.astype(jnp.bfloat16), wc_ref[...],
                         preferred_element_type=jnp.float32) + bc_ref[0]


# --------------------------------------------------------------------------
# pallas_call wrappers
# --------------------------------------------------------------------------
def embed_layernorm(x, gamma, beta, mask_col):
    B, S, H = x.shape
    return pl.pallas_call(
        embed_ln_kernel,
        out_shape=jax.ShapeDtypeStruct((B, S, H), jnp.bfloat16),
        grid=(B,),
        in_specs=[pl.BlockSpec((1, S, H), lambda b: (b, 0, 0)),
                  _wspec(gamma.shape, lambda b: (0, 0)),
                  _wspec(beta.shape, lambda b: (0, 0)),
                  pl.BlockSpec((1, S, 1), lambda b: (b, 0, 0))],
        out_specs=pl.BlockSpec((1, S, H), lambda b: (b, 0, 0)),
        compiler_params=_cparams("parallel"),
    )(x, gamma, beta, mask_col)


def attention_block(x, mask_col, mask_row, lp, num_heads):
    B, S, H = x.shape
    weights = (lp['wqkv'], lp['bqkv'], lp['wo'], lp['bo'], lp['g1'], lp['be1'])
    w_specs = [_wspec(w.shape, lambda b: (0, 0)) for w in weights]
    return pl.pallas_call(
        functools.partial(attention_kernel, num_heads),
        out_shape=jax.ShapeDtypeStruct((B, S, H), jnp.bfloat16),
        grid=(B,),
        in_specs=[pl.BlockSpec((1, S, H), lambda b: (b, 0, 0)),
                  pl.BlockSpec((1, S, 1), lambda b: (b, 0, 0)),
                  pl.BlockSpec((1, 1, S), lambda b: (b, 0, 0))] + w_specs,
        out_specs=pl.BlockSpec((1, S, H), lambda b: (b, 0, 0)),
        scratch_shapes=[pltpu.VMEM((S, H), jnp.float32)],
        compiler_params=_cparams("parallel"),
    )(x, mask_col, mask_row, *weights)


def ffn_block(x, lp):
    B, S, H = x.shape
    I = lp['w1'].shape[1]
    M = B * S
    TM = _row_tile(M)
    x2 = x.reshape(M, H)                       # contiguous reshape, free

    # Keep the full bf16 FFN weights resident in VMEM when they fit the
    # generation-dependent budget (v5e/v6e); otherwise stream I-dim tiles (v7x).
    ffn_weight_bytes = 2 * H * I * 2
    resident = ffn_weight_bytes <= VMEM_LIMIT_BYTES // 2

    if resident:
        out = pl.pallas_call(
            ffn_resident_kernel,
            out_shape=jax.ShapeDtypeStruct((M, H), jnp.bfloat16),
            grid=(M // TM,),
            in_specs=[
                pl.BlockSpec((TM, H), lambda m: (m, 0)),      # x (residual)
                _wspec((H, I), lambda m: (0, 0)),             # w1 (resident)
                _wspec((1, I), lambda m: (0, 0)),             # b1
                _wspec((I, H), lambda m: (0, 0)),             # w2 (resident)
                _wspec((1, H), lambda m: (0, 0)),             # b2
                _wspec((1, H), lambda m: (0, 0)),             # g2
                _wspec((1, H), lambda m: (0, 0)),             # be2
            ],
            out_specs=pl.BlockSpec((TM, H), lambda m: (m, 0)),
            compiler_params=_cparams("parallel"),
        )(x2, lp['w1'], lp['b1'], lp['w2'], lp['b2'], lp['g2'], lp['be2'])
    else:
        TI = FFN_TILE_I if I % FFN_TILE_I == 0 else I
        NI = I // TI
        out = pl.pallas_call(
            ffn_tiled_kernel,
            out_shape=jax.ShapeDtypeStruct((M, H), jnp.bfloat16),
            grid=(M // TM, NI),                          # reduction axis last
            in_specs=[
                pl.BlockSpec((TM, H), lambda m, i: (m, 0)),   # x (residual)
                pl.BlockSpec((H, TI), lambda m, i: (0, i)),   # w1 tile
                pl.BlockSpec((1, TI), lambda m, i: (0, i)),   # b1 tile
                pl.BlockSpec((TI, H), lambda m, i: (i, 0)),   # w2 tile
                _wspec((1, H), lambda m, i: (0, 0)),          # b2
                _wspec((1, H), lambda m, i: (0, 0)),          # g2
                _wspec((1, H), lambda m, i: (0, 0)),          # be2
            ],
            out_specs=pl.BlockSpec((TM, H), lambda m, i: (m, 0)),
            scratch_shapes=[pltpu.VMEM((TM, H), jnp.float32)],
            compiler_params=_cparams("parallel", "arbitrary"),
        )(x2, lp['w1'], lp['b1'], lp['w2'], lp['b2'], lp['g2'], lp['be2'])
    return out.reshape(B, S, H)


def pooler_classifier(cls_tok, hp, num_labels):
    B, H = cls_tok.shape
    NP = hp['wc'].shape[1]                       # already lane-padded in init
    args = (cls_tok, hp['wp'], hp['bp'], hp['wc'], hp['bc'])
    out = pl.pallas_call(
        head_kernel,
        out_shape=jax.ShapeDtypeStruct((B, NP), jnp.float32),
        grid=(1,),
        in_specs=[pl.BlockSpec(a.shape, lambda i: (0, 0)) for a in args],
        out_specs=pl.BlockSpec((B, NP), lambda i: (0, 0)),
        compiler_params=_cparams("arbitrary"),
    )(*args)
    return out[:, :num_labels]


# --------------------------------------------------------------------------
# Parameter init (deterministic, synthetic).  Matmul weights in bf16.
# --------------------------------------------------------------------------
def init_params(key, cfg):
    H, I, L, NL = cfg['hidden'], cfg['intermediate'], cfg['layers'], cfg['labels']
    ks = iter(jax.random.split(key, 8 + 4 * L))

    def w(shape, k):
        return (jax.random.normal(k, shape, jnp.float32) * 0.02
                ).astype(jnp.bfloat16)

    # classifier weight lane-padded ONCE here (avoids per-call jnp.pad).
    pad = (-NL) % LANE
    params = {
        'word_emb': jax.random.normal(next(ks), (cfg['vocab'], H), jnp.float32) * 0.02,
        'pos_emb':  jax.random.normal(next(ks), (cfg['max_pos'], H), jnp.float32) * 0.02,
        'tok_emb':  jax.random.normal(next(ks), (cfg['type_vocab'], H), jnp.float32) * 0.02,
        'emb_gamma': jnp.ones((1, H), jnp.float32),
        'emb_beta':  jnp.zeros((1, H), jnp.float32),
        'layers': [],
        'head': {
            'wp': w((H, H), next(ks)),
            'bp': jnp.zeros((1, H), jnp.float32),
            'wc': jnp.pad(w((H, NL), next(ks)), ((0, 0), (0, pad))),
            'bc': jnp.zeros((1, NL + pad), jnp.float32),
        },
    }
    for _ in range(L):
        params['layers'].append({
            # fused QKV weight: one (H, 3H) matmul / one weight DMA stream
            'wqkv': w((H, 3 * H), next(ks)),
            'bqkv': jnp.zeros((1, 3 * H), jnp.float32),
            'wo': w((H, H), next(ks)), 'bo': jnp.zeros((1, H), jnp.float32),
            'g1': jnp.ones((1, H), jnp.float32),
            'be1': jnp.zeros((1, H), jnp.float32),
            'w1': w((H, I), next(ks)), 'b1': jnp.zeros((1, I), jnp.float32),
            'w2': w((I, H), next(ks)), 'b2': jnp.zeros((1, H), jnp.float32),
            'g2': jnp.ones((1, H), jnp.float32),
            'be2': jnp.zeros((1, H), jnp.float32),
        })
    return params


# --------------------------------------------------------------------------
# Full forward pass (== DebertaV2ForSequenceClassification(...).logits)
# --------------------------------------------------------------------------
def deberta_forward(params, input_ids, attention_mask, token_type_ids, cfg):
    B, S = input_ids.shape
    pos_ids = jnp.arange(S, dtype=jnp.int32)
    emb = (jnp.take(params['word_emb'], input_ids, axis=0)
           + jnp.take(params['pos_emb'], pos_ids, axis=0)[None, :, :]
           + jnp.take(params['tok_emb'], token_type_ids, axis=0))

    m = attention_mask.astype(jnp.float32)                     # (B, S)
    mask_col = m[:, :, None]                                   # (B, S, 1)
    mask_row = m[:, None, :]                                   # (B, 1, S)

    x = embed_layernorm(emb, params['emb_gamma'], params['emb_beta'], mask_col)
    for lp in params['layers']:
        x = attention_block(x, mask_col, mask_row, lp, cfg['heads'])
        x = ffn_block(x, lp)

    cls_tok = x[:, 0, :]                                       # (B, H) bf16
    logits = pooler_classifier(cls_tok, params['head'], cfg['labels'])
    return logits


if __name__ == "__main__":
    cfg = dict(vocab=100, type_vocab=2, max_pos=32,
               hidden=64, heads=4, intermediate=128, layers=2, labels=3)
    B, S = 2, 16

    root = jax.random.PRNGKey(0)
    k_par, k_ids, k_tt = jax.random.split(root, 3)

    params = init_params(k_par, cfg)
    input_ids = jax.random.randint(k_ids, (B, S), 0, cfg['vocab'], jnp.int32)
    token_type_ids = jax.random.randint(k_tt, (B, S), 0, cfg['type_vocab'],
                                        jnp.int32)
    attention_mask = jnp.ones((B, S), jnp.int32).at[1, S - 4:].set(0)

    logits = deberta_forward(params, input_ids, attention_mask,
                             token_type_ids, cfg)
    logits = jax.block_until_ready(logits)

    assert logits.shape == (B, cfg['labels'])
    assert bool(jnp.all(jnp.isfinite(logits)))
    print("KERNEL_OK")
</pallas_src>

<mosaic_0001>
module attributes {stable_mosaic.version = 11 : i64} {
  func.func @embed_ln_kernel(%arg0: i32, %arg1: memref<1x16x64xf32, #tpu.memory_space<vmem>>, %arg2: memref<1x64xf32, #tpu.memory_space<vmem>>, %arg3: memref<1x64xf32, #tpu.memory_space<vmem>>, %arg4: memref<1x16x1xf32, #tpu.memory_space<vmem>>, %arg5: memref<1x16x64xbf16, #tpu.memory_space<vmem>>) attributes {dimension_semantics = [#tpu.dimension_semantics<parallel>], iteration_bounds = array<i64: 2>, scalar_prefetch = 0 : i64, scratch_operands = 0 : i64, tpu.core_type = #tpu.core_type<tc>, window_params = [{transform_indices = @transform_0, window_bounds = array<i64: 1, 16, 64>}, {pipeline_mode = #tpu.pipeline_mode<synchronous>, transform_indices = @transform_1, window_bounds = array<i64: 1, 64>}, {pipeline_mode = #tpu.pipeline_mode<synchronous>, transform_indices = @transform_2, window_bounds = array<i64: 1, 64>}, {transform_indices = @transform_3, window_bounds = array<i64: 1, 16, 1>}, {transform_indices = @transform_4, window_bounds = array<i64: 1, 16, 64>}]} {
    %c0 = arith.constant 0 : index
    %c0_0 = arith.constant 0 : index
    %c0_1 = arith.constant 0 : index
    %0 = vector.load %arg1[%c0, %c0_0, %c0_1] : memref<1x16x64xf32, #tpu.memory_space<vmem>>, vector<1x16x64xf32>
    %1 = vector.shape_cast %0 : vector<1x16x64xf32> to vector<16x64xf32>
    %c0_2 = arith.constant 0 : index
    %c0_3 = arith.constant 0 : index
    %2 = vector.load %arg2[%c0_2, %c0_3] : memref<1x64xf32, #tpu.memory_space<vmem>>, vector<1x64xf32>
    %3 = vector.shape_cast %2 : vector<1x64xf32> to vector<64xf32>
    %c0_4 = arith.constant 0 : index
    %c0_5 = arith.constant 0 : index
    %4 = vector.load %arg3[%c0_4, %c0_5] : memref<1x64xf32, #tpu.memory_space<vmem>>, vector<1x64xf32>
    %5 = vector.shape_cast %4 : vector<1x64xf32> to vector<64xf32>
    %cst = arith.constant dense<0.000000e+00> : vector<16xf32>
    %6 = vector.multi_reduction <add>, %1, %cst [1] : vector<16x64xf32> to vector<16xf32>
    %7 = vector.shape_cast %6 : vector<16xf32> to vector<16x1xf32>
    %cst_6 = arith.constant 6.400000e+01 : f32
    %8 = vector.broadcast %cst_6 : f32 to vector<16x1xf32>
    %9 = arith.divf %7, %8 : vector<16x1xf32>
    %10 = vector.broadcast %9 : vector<16x1xf32> to vector<16x64xf32>
    %11 = arith.subf %1, %10 : vector<16x64xf32>
    %12 = arith.mulf %11, %11 : vector<16x64xf32>
    %cst_7 = arith.constant dense<0.000000e+00> : vector<16xf32>
    %13 = vector.multi_reduction <add>, %12, %cst_7 [1] : vector<16x64xf32> to vector<16xf32>
    %14 = vector.shape_cast %13 : vector<16xf32> to vector<16x1xf32>
    %cst_8 = arith.constant 6.400000e+01 : f32
    %15 = vector.broadcast %cst_8 : f32 to vector<16x1xf32>
    %16 = arith.divf %14, %15 : vector<16x1xf32>
    %17 = vector.broadcast %9 : vector<16x1xf32> to vector<16x64xf32>
    %18 = arith.subf %1, %17 : vector<16x64xf32>
    %cst_9 = arith.constant 1.000000e-07 : f32
    %19 = vector.broadcast %cst_9 : f32 to vector<16x1xf32>
    %20 = arith.addf %16, %19 : vector<16x1xf32>
    %21 = math.rsqrt %20 : vector<16x1xf32>
    %22 = vector.broadcast %21 : vector<16x1xf32> to vector<16x64xf32>
    %23 = arith.mulf %18, %22 : vector<16x64xf32>
    %24 = vector.shape_cast %3 : vector<64xf32> to vector<1x64xf32>
    %25 = vector.broadcast %24 : vector<1x64xf32> to vector<16x64xf32>
    %26 = arith.mulf %23, %25 : vector<16x64xf32>
    %27 = vector.shape_cast %5 : vector<64xf32> to vector<1x64xf32>
    %28 = vector.broadcast %27 : vector<1x64xf32> to vector<16x64xf32>
    %29 = arith.addf %26, %28 : vector<16x64xf32>
    %c0_10 = arith.constant 0 : index
    %c0_11 = arith.constant 0 : index
    %c0_12 = arith.constant 0 : index
    %30 = vector.load %arg4[%c0_10, %c0_11, %c0_12] : memref<1x16x1xf32, #tpu.memory_space<vmem>>, vector<1x16x1xf32>
    %31 = vector.shape_cast %30 : vector<1x16x1xf32> to vector<16x1xf32>
    %32 = vector.broadcast %31 : vector<16x1xf32> to vector<16x64xf32>
    %33 = arith.mulf %29, %32 : vector<16x64xf32>
    %34 = arith.truncf %33 : vector<16x64xf32> to vector<16x64xbf16>
    %c0_13 = arith.constant 0 : index
    %c0_14 = arith.constant 0 : index
    %c0_15 = arith.constant 0 : index
    %35 = vector.load %arg5[%c0_13, %c0_14, %c0_15] : memref<1x16x64xbf16, #tpu.memory_space<vmem>>, vector<1x16x64xbf16>
    %36 = vector.shape_cast %35 : vector<1x16x64xbf16> to vector<16x64xbf16>
    %37 = vector.shape_cast %34 : vector<16x64xbf16> to vector<1x16x64xbf16>
    tpu.vector_store %arg5[%c0_13, %c0_14, %c0_15], %37 {strides = array<i32>} : memref<1x16x64xbf16, #tpu.memory_space<vmem>>, vector<1x16x64xbf16>,
    return
  }
  func.func @transform_0(%arg0: i32) -> (i32, i32, i32) {
    %c0_i32 = arith.constant 0 : i32
    %c0_i32_0 = arith.constant 0 : i32
    %c0_i32_1 = arith.constant 0 : i32
    return %arg0, %c0_i32, %c0_i32_0 : i32, i32, i32
  }
  func.func @transform_1(%arg0: i32) -> (i32, i32) {
    %c0_i32 = arith.constant 0 : i32
    %c0_i32_0 = arith.constant 0 : i32
    %c0_i32_1 = arith.constant 0 : i32
    return %c0_i32, %c0_i32_0 : i32, i32
  }
  func.func @transform_2(%arg0: i32) -> (i32, i32) {
    %c0_i32 = arith.constant 0 : i32
    %c0_i32_0 = arith.constant 0 : i32
    %c0_i32_1 = arith.constant 0 : i32
    return %c0_i32, %c0_i32_0 : i32, i32
  }
  func.func @transform_3(%arg0: i32) -> (i32, i32, i32) {
    %c0_i32 = arith.constant 0 : i32
    %c0_i32_0 = arith.constant 0 : i32
    %c0_i32_1 = arith.constant 0 : i32
    return %arg0, %c0_i32, %c0_i32_0 : i32, i32, i32
  }
  func.func @transform_4(%arg0: i32) -> (i32, i32, i32) {
    %c0_i32 = arith.constant 0 : i32
    %c0_i32_0 = arith.constant 0 : i32
    %c0_i32_1 = arith.constant 0 : i32
    return %arg0, %c0_i32, %c0_i32_0 : i32, i32, i32
  }
}

</mosaic_0001>

<llo_original>
// kernel: tpu_custom_call.1
$region0: #{tpu_custom_call.1}
  #allocation0 [shape = 'u32[]', space=smem, size = 0x4, offset = 0x4, fixed_abs, tag = 'smem constant byte address 0x4 - core index']
  #allocation1 [shape = 'u32[144,128]{1,0:T(1,128)}', space=vmem, size = 0x12000, scoped, tag = 'internal scratch']
  %s0 = inlined_call_operand.vmem [shape: f32[2,16,64], index: 0, kind: input, shape index: {}]
  %s1 = inlined_call_operand.vmem [shape: f32[1,64], index: 1, kind: input, shape index: {}]
  %s2 = inlined_call_operand.vmem [shape: f32[1,64], index: 2, kind: input, shape index: {}]
  %s3 = inlined_call_operand.vmem [shape: f32[2,16,1], index: 3, kind: input, shape index: {}]
  %s4 = inlined_call_operand.hbm [shape: bf16[2,16,64], index: 4, kind: output, shape index: {}]
  %s5 = sld [smem:[#allocation0]]
  $region49: #{tpu_custom_call.1} parent=0
    _
  %s7 = ssub.s32 1, %s5
  %s8 = scalar_select 0, %s7, %s5
  $region1: #{tpu_custom_call.1} parent=0
    #allocation2 [shape = 'u8[8192]{0}', space=vmem, size = 0x2000, scoped, tag = 'output window, operand 0']
    #allocation3 [shape = 's32[2]{0}', space=sflag, size = 0x8, scoped, tag = 'scoped memory for tpu_custom_call.1']
    %9 = vsyncpa [#allocation3], 0
    %s10 = scalar_lea.sflag [#allocation3], 1
    %11 = vsyncpa %s10, 0
    loop: start=0, step=1, limit=4
    $region2: #{tpu_custom_call.1} parent=1 // loop_pre_header
      _
    $region3: #{tpu_custom_call.1} parent=1 // loop_header
      %s13 = sphi 0, %s17
      %p14 = scmp.ge.s32.totalorder %s13, 4
      %s23 = sphi 0, %s25
      %s26 = sphi 0, %s23
      %s27 = sphi 0, %s26
      %s43 = sphi 0, %s27
      %s47 = sphi 0, %s47
      %s49 = sphi 0, %s47
      %s50 = sphi 0, %s49
      %s64 = sphi 0, %s50
      %s68 = sphi 0, %s68
      %s70 = sphi 0, %s68
      %s71 = sphi 0, %s70
      %s85 = sphi 0, %s71
      %s91 = sphi 0, %s93
      %s94 = sphi 0, %s91
      %s95 = sphi 0, %s94
      %s111 = sphi 0, %s95
      %s117 = sphi 0, %s119
      %s120 = sphi 0, %s117
      %s121 = sphi 0, %s120
      %s137 = sphi 0, %s121
    $region4: #{tpu_custom_call.1} parent=1 // loop_header_branch
      %16 = sbr.rel (%p14) target = $region8
    $region5: #{tpu_custom_call.1} parent=1 // loop_body
      %s18 = ssub.s32 %s13, 1
      %s19 = ssub.s32 %s13, 2
      %s20 = sadd.s32 %s13, 1
      %s21 = ssub.s32 %s13, %s20
      %p22 = scmp.eq.s32.totalorder %s21, 0
      %s24 = sadd.s32 %s23, 1
      %s25 = scalar_select %p22, %s23, %s24
      %p28 = pneg %p22
      %p29 = scmp.eq.s32.totalorder %s13, 1
      %p30 = por %p28, %p29
      %p31 = scmp.ne.s32.totalorder %s23, %s26
      %p32 = scmp.eq.s32.totalorder %s13, 0
      %p33 = por %p31, %p32
      %p34 = scmp.ne.s32.totalorder %s23, %s26
      %p35 = scmp.eq.s32.totalorder %s18, 1
      %p36 = por %p34, %p35
      %p37 = scmp.ne.s32.totalorder %s26, %s27
      %p38 = scmp.eq.s32.totalorder %s18, 0
      %p39 = por %p37, %p38
      %p40 = scmp.ne.s32.totalorder %s26, %s27
      %p41 = scmp.eq.s32.totalorder %s19, 1
      %p42 = por %p40, %p41
      %p44 = scmp.ne.s32.totalorder %s27, %s43
      %p45 = scmp.eq.s32.totalorder %s19, 0
      %p46 = por %p44, %p45
      %s48 = sadd.s32 %s47, 1
      %p51 = scmp.eq.s32.totalorder %s13, 1
      %p52 = scmp.ne.s32.totalorder %s47, %s49
      %p53 = scmp.eq.s32.totalorder %s13, 0
      %p54 = por %p52, %p53
      %p55 = scmp.ne.s32.totalorder %s47, %s49
      %p56 = scmp.eq.s32.totalorder %s18, 1
      %p57 = por %p55, %p56
      %p58 = scmp.ne.s32.totalorder %s49, %s50
      %p59 = scmp.eq.s32.totalorder %s18, 0
      %p60 = por %p58, %p59
      %p61 = scmp.ne.s32.totalorder %s49, %s50
      %p62 = scmp.eq.s32.totalorder %s19, 1
      %p63 = por %p61, %p62
      %p65 = scmp.ne.s32.totalorder %s50, %s64
      %p66 = scmp.eq.s32.totalorder %s19, 0
      %p67 = por %p65, %p66
      %s69 = sadd.s32 %s68, 1
      %p72 = scmp.eq.s32.totalorder %s13, 1
      %p73 = scmp.ne.s32.totalorder %s68, %s70
      %p74 = scmp.eq.s32.totalorder %s13, 0
      %p75 = por %p73, %p74
      %p76 = scmp.ne.s32.totalorder %s68, %s70
      %p77 = scmp.eq.s32.totalorder %s18, 1
      %p78 = por %p76, %p77
      %p79 = scmp.ne.s32.totalorder %s70, %s71
      %p80 = scmp.eq.s32.totalorder %s18, 0
      %p81 = por %p79, %p80
      %p82 = scmp.ne.s32.totalorder %s70, %s71
      %p83 = scmp.eq.s32.totalorder %s19, 1
      %p84 = por %p82, %p83
      %p86 = scmp.ne.s32.totalorder %s71, %s85
      %p87 = scmp.eq.s32.totalorder %s19, 0
      %p88 = por %p86, %p87
      %s89 = ssub.s32 %s13, %s20
      %p90 = scmp.eq.s32.totalorder %s89, 0
      %s92 = sadd.s32 %s91, 1
      %s93 = scalar_select %p90, %s91, %s92
      %p96 = pneg %p90
      %p97 = scmp.eq.s32.totalorder %s13, 1
      %p98 = por %p96, %p97
      %p99 = scmp.ne.s32.totalorder %s91, %s94
      %p100 = scmp.eq.s32.totalorder %s13, 0
      %p101 = por %p99, %p100
      %p102 = scmp.ne.s32.totalorder %s91, %s94
      %p103 = scmp.eq.s32.totalorder %s18, 1
      %p104 = por %p102, %p103
      %p105 = scmp.ne.s32.totalorder %s94, %s95
      %p106 = scmp.eq.s32.totalorder %s18, 0
      %p107 = por %p105, %p106
      %p108 = scmp.ne.s32.totalorder %s94, %s95
      %p109 = scmp.eq.s32.totalorder %s19, 1
      %p110 = por %p108, %p109
      %p112 = scmp.ne.s32.totalorder %s95, %s111
      %p113 = scmp.eq.s32.totalorder %s19, 0
      %p114 = por %p112, %p113
      %s115 = ssub.s32 %s13, %s20
      %p116 = scmp.eq.s32.totalorder %s115, 0
      %s118 = sadd.s32 %s117, 1
      %s119 = scalar_select %p116, %s117, %s118
      %p122 = pneg %p116
      %p123 = scmp.eq.s32.totalorder %s13, 1
      %p124 = por %p122, %p123
      %p125 = scmp.ne.s32.totalorder %s117, %s120
      %p126 = scmp.eq.s32.totalorder %s13, 0
      %p127 = por %p125, %p126
      %p128 = scmp.ne.s32.totalorder %s117, %s120
      %p129 = scmp.eq.s32.totalorder %s18, 1
      %p130 = por %p128, %p129
      %p131 = scmp.ne.s32.totalorder %s120, %s121
      %p132 = scmp.eq.s32.totalorder %s18, 0
      %p133 = por %p131, %p132
      %p134 = scmp.ne.s32.totalorder %s120, %s121
      %p135 = scmp.eq.s32.totalorder %s19, 1
      %p136 = por %p134, %p135
      %p138 = scmp.ne.s32.totalorder %s121, %s137
      %p139 = scmp.eq.s32.totalorder %s19, 0
      %p140 = por %p138, %p139
      %p141 = scmp.le.s32.totalorder 1, %s13
      %p142 = scmp.lt.s32.totalorder %s13, 3
      %p143 = pnand %p141, %p142
      %p144 = pneg %p143
      // Predicated region
      $region9: #{tpu_custom_call.1} parent=5 // pred_check
        _
      $region10: #{tpu_custom_call.1} parent=5 // pred_check_branch
        %146 = sbr.rel (%p143) target = $region12
      $region11: #{tpu_custom_call.1} parent=5 // pred_region
        %s147 = ssub.s32 %s13, 1
        // Predicated region
        $region13: #{tpu_custom_call.1} parent=11 // pred_check
          %p148 = pneg %p60
        $region14: #{tpu_custom_call.1} parent=11 // pred_check_branch
          %150 = sbr.rel (%p148) target = $region16
        $region15: #{tpu_custom_call.1} parent=11 // pred_region
          _
        $region16: #{tpu_custom_call.1} parent=11 // pred_fallthru
          _
        // Predicated region
        $region17: #{tpu_custom_call.1} parent=11 // pred_check
          %p151 = pneg %p81
        $region18: #{tpu_custom_call.1} parent=11 // pred_check_branch
          %153 = sbr.rel (%p151) target = $region20
        $region19: #{tpu_custom_call.1} parent=11 // pred_region
          _
        $region20: #{tpu_custom_call.1} parent=11 // pred_fallthru
          _
      $region12: #{tpu_custom_call.1} parent=5 // pred_fallthru
        _
      %p154 = scmp.lt.s32.totalorder %s13, 2
      // Predicated region
      $region21: #{tpu_custom_call.1} parent=5 // pred_check
        %p155 = pneg %p154
      $region22: #{tpu_custom_call.1} parent=5 // pred_check_branch
        %157 = sbr.rel (%p155) target = $region24
      $region23: #{tpu_custom_call.1} parent=5 // pred_region
        // Predicated region
        $region25: #{tpu_custom_call.1} parent=23 // pred_check
          %p158 = pneg %p33
        $region26: #{tpu_custom_call.1} parent=23 // pred_check_branch
          %160 = sbr.rel (%p158) target = $region28
        $region27: #{tpu_custom_call.1} parent=23 // pred_region
          %p161 = scmp.lt.s32.totalorder %s13, 1
          %s162 = scalar_select %p161, %s13, 1
          %s163 = smul.addr %s162, 2
          %s164 = smul.addr %s163, 8
          %s165 = scalar_lea.vmem %s0, %s164
        $region28: #{tpu_custom_call.1} parent=23 // pred_fallthru
          _
        // Predicated region
        $region29: #{tpu_custom_call.1} parent=23 // pred_check
          %p166 = pneg %p101
        $region30: #{tpu_custom_call.1} parent=23 // pred_check_branch
          %168 = sbr.rel (%p166) target = $region32
        $region31: #{tpu_custom_call.1} parent=23 // pred_region
          %p169 = scmp.lt.s32.totalorder %s13, 1
          %s170 = scalar_select %p169, %s13, 1
          %s171 = smul.addr %s170, 2
          %s172 = smul.addr %s171, 8
          %s173 = scalar_lea.vmem %s3, %s172
        $region32: #{tpu_custom_call.1} parent=23 // pred_fallthru
          _
      $region24: #{tpu_custom_call.1} parent=5 // pred_fallthru
        _
      %p174 = scmp.le.s32.totalorder 1, %s13
      %p175 = scmp.lt.s32.totalorder %s13, 3
      %p176 = pnand %p174, %p175
      %p177 = pneg %p176
      // Predicated region
      $region33: #{tpu_custom_call.1} parent=5 // pred_check
        _
      $region34: #{tpu_custom_call.1} parent=5 // pred_check_branch
        %179 = sbr.rel (%p176) target = $region36
      $region35: #{tpu_custom_call.1} parent=5 // pred_region
        %s180 = ssub.s32 %s13, 1
        %p181 = scmp.lt.s32.totalorder %s18, 1
        %s182 = scalar_select %p181, %s18, 1
        %s183 = smul.addr %s182, 2
        %s184 = smul.addr %s183, 8
        %s185 = scalar_lea.vmem %s0, %s184
        %p186 = pneg %p39
        %p187 = pneg %p36
        %p188 = pneg %p60
        %p189 = pneg %p57
        %p190 = pneg %p81
        %p191 = pneg %p78
        %p192 = scmp.lt.s32.totalorder %s18, 1
        %s193 = scalar_select %p192, %s18, 1
        %s194 = smul.addr %s193, 2
        %s195 = smul.addr %s194, 8
        %s196 = scalar_lea.vmem %s3, %s195
        %p197 = pneg %p107
        %p198 = pneg %p104
        %p199 = pneg %p133
        %p200 = pneg %p130
        %s201 = sand.u32 %s120, 1
        %s202 = scalar_lea.sflag [#allocation3], %s201
        %s203 = sand.u32 %s120, 1
        %s204 = smul.addr %s203, 8
        %s205 = scalar_lea.vmem [#allocation2], %s204
        %p206 = scmp.lt.s32.totalorder %s18, 1
        %s207 = scalar_select %p206, %s18, 1
        %s208 = smul.addr %s207, 2
        %s209 = smul.addr %s208, 8
        %s210 = scalar_lea.vmem %s0, %s209
        %p211 = scmp.lt.s32.totalorder %s18, 1
        %s212 = scalar_select %p211, %s18, 1
        %s213 = smul.addr %s212, 2
        %s214 = smul.addr %s213, 8
        %s215 = scalar_lea.vmem %s3, %s214
        %v216 = vld [vmem:[%s210] sm:$0xff]
        %v217 = vld [vmem:[%s210 + $0x8] sm:$0xff]
        %v218 = vld [vmem:[%s1] sm:$0x1]
        %v219 = vld [vmem:[%s2] sm:$0x1]
        %vm220 = vcmask 523264
        %v221 = vsel %vm220, %v216, 0.0
        %222 = vadd.xlane.f32.xlu0 %v221
        %v223 = vpop.xlane.xlu0 %222
        %v224 = vsel %vm220, %v217, 0.0
        %225 = vadd.xlane.f32.xlu0 %v224
        %v226 = vpop.xlane.xlu0 %225
        %v227 = vrcp.pop 64.0
        %v228 = vmul.f32 %v223, %v227
        %v229 = vmul.f32 %v226, %v227
        %v230 = vsub.f32 %v216, %v228
        %v231 = vsub.f32 %v217, %v229
        %v232 = vmul.f32 %v230, %v230
        %v233 = vmul.f32 %v231, %v231
        %v234 = vsel %vm220, %v232, 0.0
        %235 = vadd.xlane.f32.xlu0 %v234
        %v236 = vpop.xlane.xlu0 %235
        %v237 = vsel %vm220, %v233, 0.0
        %238 = vadd.xlane.f32.xlu0 %v237
        %v239 = vpop.xlane.xlu0 %238
        %v240 = vmul.f32 %v236, %v227
        %v241 = vmul.f32 %v239, %v227
        %v242 = vadd.f32 %v240, 1e-07
        %v243 = vadd.f32 %v241, 1e-07
        %v244 = vrsqrt.pop %v242
        %v245 = vrsqrt.pop %v243
        %v246 = vmul.f32 %v230, %v244
        %v247 = vmul.f32 %v231, %v245
        %v249 = vlaneseq
        %v250 = vshrl.u32 %v249, 7
        %v251 = vsub.s32 0, %v250
        %v252 = vrot.slane %v218, %v251
        %v254 = vmul.f32 %v246, %v252
        %v255 = vmul.f32 %v247, %v252
        %v257 = vlaneseq
        %v258 = vshrl.u32 %v257, 7
        %v259 = vsub.s32 0, %v258
        %v260 = vrot.slane %v219, %v259
        %v262 = vadd.f32 %v254, %v260
        %v263 = vadd.f32 %v255, %v260
        %v264 = vld [vmem:[%s215] sm:$0xff]
        %v265 = vld [vmem:[%s215 + $0x8] sm:$0xff]
        %267 = vset.pattern.permute.xlu0 0
        %268 = vperm.xlu0 %267, %v264
        %v269 = vpop.permute.xlu0 %268
        %272 = vset.pattern.permute.xlu0 0
        %273 = vperm.xlu0 %272, %v265
        %v274 = vpop.permute.xlu0 %273
        %v276 = vmul.f32 %v262, %v269
        %v277 = vmul.f32 %v263, %v274
        %v278 = vpack.c.bf16 %v277, %v276
        %v280 = vunpack.c.l.b16 %v278
        %v281 = vunpack.c.h.b16 %v278
        %v282 = vpack.c.b16 %v280, %v280
        %v283 = vpack.c.b16 %v281, %v281
        %vm286 = vcmask 519168
        %287 = vst.msk [vmem:[%s205] sm:$0xf] %vm286, %v282
        %288 = vst.msk [vmem:[%s205 + $0x4] sm:$0xf] %vm286, %v283
        %s289 = sand.u32 %s120, 1
        %s290 = scalar_lea.sflag [#allocation3], %s289
        %s291 = sand.u32 %s120, 1
        %s292 = smul.addr %s291, 8
        %s293 = scalar_lea.vmem [#allocation2], %s292
        // Predicated region
        $region37: #{tpu_custom_call.1} parent=35 // pred_check
          %p294 = pneg %p130
        $region38: #{tpu_custom_call.1} parent=35 // pred_check_branch
          %296 = sbr.rel (%p294) target = $region40
        $region39: #{tpu_custom_call.1} parent=35 // pred_region
          %s298 = ssub.s32 128, 128
          %299 = vsyncadd %s290, %s298
          %s300 = smul.addr %s18, 2
          %s301 = smul.addr %s300, 64
          %s302 = scalar_lea.hbm %s4, %s301
          %s303 = sshll.u32 %s293, 4
          %s304 = int_to_ptr.vmem [resolvable:$true] %s303
          %309 = dma.vmem_to_hbm [thread:$0]  %s304, 128, %s302, %s290, 64, 64, 4
        $region40: #{tpu_custom_call.1} parent=35 // pred_fallthru
          _
      $region36: #{tpu_custom_call.1} parent=5 // pred_fallthru
        _
      %p310 = scmp.le.s32.totalorder 2, %s13
      // Predicated region
      $region41: #{tpu_custom_call.1} parent=5 // pred_check
        %p311 = pneg %p310
      $region42: #{tpu_custom_call.1} parent=5 // pred_check_branch
        %313 = sbr.rel (%p311) target = $region44
      $region43: #{tpu_custom_call.1} parent=5 // pred_region
        %s314 = ssub.s32 %s13, 2
        // Predicated region
        $region45: #{tpu_custom_call.1} parent=43 // pred_check
          %p315 = pneg %p136
        $region46: #{tpu_custom_call.1} parent=43 // pred_check_branch
          %317 = sbr.rel (%p315) target = $region48
        $region47: #{tpu_custom_call.1} parent=43 // pred_region
          %s318 = sand.u32 %s121, 1
          %s319 = scalar_lea.sflag [#allocation3], %s318
          %s320 = sand.u32 %s121, 1
          %s321 = smul.addr %s320, 8
          %s322 = scalar_lea.vmem [#allocation2], %s321
          %323 = dma.done %s319, 128
        $region48: #{tpu_custom_call.1} parent=43 // pred_fallthru
          _
      $region44: #{tpu_custom_call.1} parent=5 // pred_fallthru
        _
    $region6: #{tpu_custom_call.1} parent=1 // loop_footer
      %s17 = sadd.s32 1, %s13
    $region7: #{tpu_custom_call.1} parent=1 // loop_footer_branch
      %12 = sbr.rel target = $region3
    $region8: #{tpu_custom_call.1} parent=1 // loop_exit
      _
    %324 = vsyncpa [#allocation3], 1
    %s325 = scalar_lea.sflag [#allocation3], 1
    %326 = vsyncpa %s325, 1

</llo_original>
